<compile_context>
chip_gen: v6e
topology: v6e:2x2x1
jax: 0.10.0
libtpu: 0.0.40
codegen_flags: <defaults>
</compile_context>

<pallas_src>
import functools

import jax
import jax.numpy as jnp
from jax.experimental import pallas as pl
from jax.experimental.pallas import tpu as pltpu


_VMEM = functools.partial(pl.BlockSpec, memory_space=pltpu.MemorySpace.VMEM)


def _elu(x):
    # F.elu, alpha = 1.0 (computed in f32)
    return jnp.where(x > 0, x, jnp.exp(x) - 1.0)


def _post(h):
    """elu -> whole-tensor LayerNorm (elementwise_affine=False) -> dropout(eval)=id.

    One-pass statistics: sum and sum-of-squares are independent reductions
    (no serialized mean -> centered second pass).
    """
    h = _elu(h)
    n_elem = float(h.size)                       # static
    s = jnp.sum(h)
    ss = jnp.sum(h * h)
    mu = s / n_elem
    var = jnp.maximum(ss / n_elem - mu * mu, 0.0)
    return (h - mu) * jax.lax.rsqrt(var + 1e-5)


# --------------------------- fused Pallas kernel -----------------------------

def _gencoder_fused_kernel(
    x_ref, adj_ref, m_ref, negmask_ref,
    lin1_w_ref, lin1_b_ref,
    l0_w1_ref, l0_b1_ref, l0_w2_ref, l0_b2_ref,
    l1_w1_ref, l1_b1_ref, l1_w2_ref, l1_b2_ref,
    out_w_ref, out_b_ref, cls_w_ref, cls_b_ref,
    logits_ref, emb_ref,
):
    f32 = jnp.float32
    bf16 = jnp.bfloat16

    adj = adj_ref[...]                                   # [N, N] bf16 (counts exact <=256)

    # ---- x0 = F.elu(lin1(x)) -------------------------------------------------
    x0 = jnp.dot(x_ref[...], lin1_w_ref[...], preferred_element_type=f32)
    x0 = _elu(x0 + lin1_b_ref[...])                      # [N, H] f32
    x0_bf = x0.astype(bf16)                              # cast once: agg0 + mean-pool

    # ---- layer 0: NaSingleOp / GINConv(eps=0) + MLP(H->H->H) -----------------
    # TODO(synk): on v7x the A@X aggregations could use the fp8 MXU path
    # (adjacency 0/1 is exact in e4m3) for 2x aggregation throughput.
    agg0 = jnp.dot(adj, x0_bf, preferred_element_type=f32)
    h = (x0 + agg0).astype(bf16)                         # (1+eps)*x + neighbor sum
    h = jnp.dot(h, l0_w1_ref[...], preferred_element_type=f32) + l0_b1_ref[...]
    h = jnp.maximum(h, 0.0).astype(bf16)
    h = jnp.dot(h, l0_w2_ref[...], preferred_element_type=f32) + l0_b2_ref[...]
    x1 = _post(h)                                        # [N, H] f32
    x1_bf = x1.astype(bf16)                              # cast once: agg1 + mean-pool

    # ---- layer 1: NaDisenOp (k=4) as ONE block-diagonal [H,H] bf16 matmul ----
    agg1 = jnp.dot(adj, x1_bf, preferred_element_type=f32)
    h = (x1 + agg1).astype(bf16)
    h = jnp.dot(h, l1_w1_ref[...], preferred_element_type=f32) + l1_b1_ref[...]
    h = jnp.maximum(h, 0.0).astype(bf16)
    h = jnp.dot(h, l1_w2_ref[...], preferred_element_type=f32) + l1_b2_ref[...]
    x2 = _post(h)                                        # [N, H] f32
    x2_bf = x2.astype(bf16)

    # ---- Readout_trivial: per-graph [max(gr) || mean(gr)], gr = [x0|x1|x2] ---
    gr = jnp.concatenate([x0, x1, x2], axis=1)           # [N, 3H] f32 (VMEM only)
    gr_bf = jnp.concatenate([x0_bf, x1_bf, x2_bf], axis=1)

    m_bf = m_ref[...]                                    # [G, N] bf16 one-hot membership
    counts = jnp.sum(m_bf.astype(f32), axis=1, keepdims=True)          # [G, 1]
    inv_counts = pl.reciprocal(jnp.maximum(counts, 1.0), approx=True)  # empty-graph guard

    # Max-pool: additive node-major mask (0 member / -1e30 otherwise), static
    # loop over G — no [G,N,H] broadcast, no per-layer where/member rebuild.
    neg = negmask_ref[...]                               # [N, G] f32
    g = m_bf.shape[0]
    max_rows = [jnp.max(gr + neg[:, i:i + 1], axis=0, keepdims=True) for i in range(g)]
    maxp = jnp.concatenate(max_rows, axis=0)             # [G, 3H]
    # Mean-pool for all three layers in one dot.
    meanp = jnp.dot(m_bf, gr_bf, preferred_element_type=f32) * inv_counts  # [G, 3H]

    # lin_output as a single well-shaped dot over the fused [G, 6H] readout.
    pooled = jnp.concatenate([maxp, meanp], axis=1).astype(bf16)           # [G, 6H]
    x5 = jnp.dot(pooled, out_w_ref[...], preferred_element_type=f32) + out_b_ref[...]
    x5 = _elu(x5)                                        # [G, H] f32
    emb_ref[...] = x5

    logits = jnp.dot(x5.astype(bf16), cls_w_ref[...], preferred_element_type=f32) + cls_b_ref[...]
    mx = jnp.max(logits, axis=-1, keepdims=True)         # log_softmax (mol=False)
    shifted = logits - mx
    lse = jnp.log(jnp.sum(jnp.exp(shifted), axis=-1, keepdims=True))
    logits_ref[...] = shifted - lse


# ---------------------------- pallas_call wrapper -----------------------------

def _vmem_limit_bytes():
    """Generation-aware VMEM budget: capacity minus 8 MiB headroom."""
    cap = 128 * 1024 * 1024
    try:
        info = pltpu.get_tpu_info()
        cap = int(getattr(info, "vmem_capacity_bytes", cap))
    except Exception:
        pass
    return max(cap - 8 * 1024 * 1024, 32 * 1024 * 1024)


def gencoder_apply(params, x, adj_bf16, m_bf16, negmask):
    hidden = params["lin1_w"].shape[1]
    out_dim = params["cls_w"].shape[1]
    g = m_bf16.shape[0]

    bf = lambda a: a.astype(jnp.bfloat16)
    args = (
        bf(x), adj_bf16, m_bf16, negmask.astype(jnp.float32),
        bf(params["lin1_w"]), params["lin1_b"],
        bf(params["l0_w1"]), params["l0_b1"], bf(params["l0_w2"]), params["l0_b2"],
        bf(params["l1_w1"]), params["l1_b1"], bf(params["l1_w2"]), params["l1_b2"],
        bf(params["out_w"]), params["out_b"],
        bf(params["cls_w"]), params["cls_b"],
    )
    # TODO(synk): at large N, move to a ("parallel", ...) grid over node-row
    # tiles (adj with pipeline_mode=pl.Buffered(2-3)) so v7x's second
    # TensorCore is used and the N^2 adjacency DMA pipelines with the MXU;
    # also pad HIDDEN/readout widths to 128 lanes if the deployed config
    # keeps H=32.  The single-block kernel below targets the regime where
    # everything fits VMEM.
    return pl.pallas_call(
        _gencoder_fused_kernel,
        out_shape=(jax.ShapeDtypeStruct((g, out_dim), jnp.float32),
                   jax.ShapeDtypeStruct((g, hidden), jnp.float32)),
        in_specs=[_VMEM()] * len(args),
        out_specs=(_VMEM(), _VMEM()),
        compiler_params=pltpu.CompilerParams(vmem_limit_bytes=_vmem_limit_bytes()),
    )(*args)


# ------------------------------ parameters ------------------------------------

def _block_diag(blocks):
    k = len(blocks)
    h4 = blocks[0].shape[0]
    out = jnp.zeros((k * h4, k * h4), blocks[0].dtype)
    for i, b in enumerate(blocks):
        out = out.at[i * h4:(i + 1) * h4, i * h4:(i + 1) * h4].set(b)
    return out


def init_params(key, in_dim, hidden, out_dim, num_layers=2, k=4):
    h4 = hidden // k
    ks = iter(jax.random.split(key, 32))

    def w(shape, scale=0.1):
        return (scale * jax.random.normal(next(ks), shape)).astype(jnp.float32)

    p = {}
    p["lin1_w"] = w((in_dim, hidden))
    p["lin1_b"] = w((1, hidden))
    # layer 0: NaSingleOp -> single GIN MLP (Linear->ReLU->Linear) on full H.
    p["l0_w1"] = w((hidden, hidden))
    p["l0_b1"] = w((1, hidden))
    p["l0_w2"] = w((hidden, hidden))
    p["l0_b2"] = w((1, hidden))
    # layer 1: NaDisenOp (k=4) -> k independent GIN MLPs on H//4 chunks,
    # materialized ONCE as block-diagonal [H,H] weights (exactly equivalent
    # to hsplit -> per-chunk MLP -> hstack) so the kernel runs one MXU dot.
    p["l1_w1"] = _block_diag([w((h4, h4)) for _ in range(k)])
    p["l1_b1"] = w((1, hidden))
    p["l1_w2"] = _block_diag([w((h4, h4)) for _ in range(k)])
    p["l1_b2"] = w((1, hidden))
    # (op_linear modules unused: with_conv_linear=False)
    # lin_output: hidden*2*(num_layers+1) -> hidden, rows ordered
    # [max(x0)|max(x1)|max(x2)|mean(x0)|mean(x1)|mean(x2)].
    p["out_w"] = w((hidden * 2 * (num_layers + 1), hidden))
    p["out_b"] = w((1, hidden))
    # classifier: hidden -> out_dim
    p["cls_w"] = w((hidden, out_dim))
    p["cls_b"] = w((1, out_dim))
    return p


# ------------------------------- forward --------------------------------------

def gencoder_forward(params, x, edge_index, batch, *, num_graphs):
    n = x.shape[0]
    # edge_attr is None -> add_self_loops(edge_index, num_nodes=N)
    loops = jnp.arange(n, dtype=edge_index.dtype)
    ei = jnp.concatenate([edge_index, jnp.stack([loops, loops])], axis=1)
    src, dst = ei[0], ei[1]
    # Dense adjacency built directly in bf16 (edge multiplicity exact <= 256):
    # no N^2 f32 HBM materialization + convert pass.  Row = destination.
    # TODO(synk): for large sparse graphs replace with an edge-list / CSR
    # gather-scatter aggregation (PrefetchScalarGridSpec) instead of A@X.
    adj = jnp.zeros((n, n), jnp.bfloat16).at[dst, src].add(
        jnp.ones(src.shape, jnp.bfloat16))
    # edge_weights = ones(E) in the reference; GINConv ignores edge weights.

    # TODO(synk): Pooling_trivial source unavailable -> treated as identity
    # pass-through (no node drop) before the readout.
    member = batch[None, :] == jnp.arange(num_graphs, dtype=batch.dtype)[:, None]
    m = member.astype(jnp.bfloat16)                                  # [G, N]
    # Node-major additive max-pool mask: 0 for members, -1e30 otherwise.
    negmask = jnp.where(member, 0.0, -1e30).astype(jnp.float32).T    # [N, G]

    return gencoder_apply(params, x.astype(jnp.float32), adj, m, negmask)


# --------------------------------- main ---------------------------------------

if __name__ == "__main__":
    N, IN_DIM, HIDDEN, OUT_DIM, NUM_GRAPHS = 16, 8, 32, 4, 2
    key = jax.random.PRNGKey(0)
    k_x, k_src, k_dst, k_p = jax.random.split(key, 4)

    x = jax.random.normal(k_x, (N, IN_DIM), jnp.float32)
    # Edges stay within each graph (two graphs of 8 nodes each).
    E_per = 12
    src0 = jax.random.randint(k_src, (E_per,), 0, N // 2, dtype=jnp.int32)
    dst0 = jax.random.randint(k_dst, (E_per,), 0, N // 2, dtype=jnp.int32)
    edge_index = jnp.stack([jnp.concatenate([src0, src0 + N // 2]),
                            jnp.concatenate([dst0, dst0 + N // 2])])
    batch = jnp.repeat(jnp.arange(NUM_GRAPHS, dtype=jnp.int32), N // NUM_GRAPHS)

    params = init_params(k_p, IN_DIM, HIDDEN, OUT_DIM)

    fwd = jax.jit(functools.partial(gencoder_forward, num_graphs=NUM_GRAPHS))
    logits, emb = fwd(params, x, edge_index, batch)
    jax.block_until_ready((logits, emb))

    assert logits.shape == (NUM_GRAPHS, OUT_DIM)
    assert emb.shape == (NUM_GRAPHS, HIDDEN)
    assert bool(jnp.all(jnp.isfinite(logits))) and bool(jnp.all(jnp.isfinite(emb)))
    print("KERNEL_OK")
</pallas_src>

<mosaic_0001>
module attributes {stable_mosaic.version = 11 : i64} {
  func.func @_gencoder_fused_kernel(%arg0: memref<16x8xbf16, #tpu.memory_space<vmem>>, %arg1: memref<16x16xbf16, #tpu.memory_space<vmem>>, %arg2: memref<2x16xbf16, #tpu.memory_space<vmem>>, %arg3: memref<16x2xf32, #tpu.memory_space<vmem>>, %arg4: memref<8x32xbf16, #tpu.memory_space<vmem>>, %arg5: memref<1x32xf32, #tpu.memory_space<vmem>>, %arg6: memref<32x32xbf16, #tpu.memory_space<vmem>>, %arg7: memref<1x32xf32, #tpu.memory_space<vmem>>, %arg8: memref<32x32xbf16, #tpu.memory_space<vmem>>, %arg9: memref<1x32xf32, #tpu.memory_space<vmem>>, %arg10: memref<32x32xbf16, #tpu.memory_space<vmem>>, %arg11: memref<1x32xf32, #tpu.memory_space<vmem>>, %arg12: memref<32x32xbf16, #tpu.memory_space<vmem>>, %arg13: memref<1x32xf32, #tpu.memory_space<vmem>>, %arg14: memref<192x32xbf16, #tpu.memory_space<vmem>>, %arg15: memref<1x32xf32, #tpu.memory_space<vmem>>, %arg16: memref<32x4xbf16, #tpu.memory_space<vmem>>, %arg17: memref<1x4xf32, #tpu.memory_space<vmem>>, %arg18: memref<2x4xf32, #tpu.memory_space<vmem>>, %arg19: memref<2x32xf32, #tpu.memory_space<vmem>>) attributes {dimension_semantics = [], scalar_prefetch = 0 : i64, scratch_operands = 0 : i64, tpu.core_type = #tpu.core_type<tc>} {
    %c0 = arith.constant 0 : index
    %c0_0 = arith.constant 0 : index
    %0 = vector.load %arg1[%c0, %c0_0] : memref<16x16xbf16, #tpu.memory_space<vmem>>, vector<16x16xbf16>
    %c0_1 = arith.constant 0 : index
    %c0_2 = arith.constant 0 : index
    %1 = vector.load %arg0[%c0_1, %c0_2] : memref<16x8xbf16, #tpu.memory_space<vmem>>, vector<16x8xbf16>
    %c0_3 = arith.constant 0 : index
    %c0_4 = arith.constant 0 : index
    %2 = vector.load %arg4[%c0_3, %c0_4] : memref<8x32xbf16, #tpu.memory_space<vmem>>, vector<8x32xbf16>
    %cst = arith.constant dense<0.000000e+00> : vector<16x32xf32>
    %3 = tpu.matmul %1, %2, %cst {dimension_numbers = #tpu.dot_dimension_numbers<[1], [0], [0], [1], [0, 0, 1, 1], [], []>} : vector<16x8xbf16>, vector<8x32xbf16>, vector<16x32xf32> -> vector<16x32xf32>
    %c0_5 = arith.constant 0 : index
    %c0_6 = arith.constant 0 : index
    %4 = vector.load %arg5[%c0_5, %c0_6] : memref<1x32xf32, #tpu.memory_space<vmem>>, vector<1x32xf32>
    %5 = vector.broadcast %4 : vector<1x32xf32> to vector<16x32xf32>
    %6 = arith.addf %3, %5 : vector<16x32xf32>
    %cst_7 = arith.constant 0.000000e+00 : f32
    %7 = vector.broadcast %cst_7 : f32 to vector<16x32xf32>
    %8 = arith.cmpf ogt, %6, %7 : vector<16x32xf32>
    %9 = math.exp %6 : vector<16x32xf32>
    %cst_8 = arith.constant 1.000000e+00 : f32
    %10 = vector.broadcast %cst_8 : f32 to vector<16x32xf32>
    %11 = arith.subf %9, %10 : vector<16x32xf32>
    %12 = arith.select %8, %6, %11 : vector<16x32xi1>, vector<16x32xf32>
    %13 = arith.truncf %12 : vector<16x32xf32> to vector<16x32xbf16>
    %cst_9 = arith.constant dense<0.000000e+00> : vector<16x32xf32>
    %14 = tpu.matmul %0, %13, %cst_9 {dimension_numbers = #tpu.dot_dimension_numbers<[1], [0], [0], [1], [0, 0, 1, 1], [], []>} : vector<16x16xbf16>, vector<16x32xbf16>, vector<16x32xf32> -> vector<16x32xf32>
    %15 = arith.addf %12, %14 : vector<16x32xf32>
    %16 = arith.truncf %15 : vector<16x32xf32> to vector<16x32xbf16>
    %c0_10 = arith.constant 0 : index
    %c0_11 = arith.constant 0 : index
    %17 = vector.load %arg6[%c0_10, %c0_11] : memref<32x32xbf16, #tpu.memory_space<vmem>>, vector<32x32xbf16>
    %cst_12 = arith.constant dense<0.000000e+00> : vector<16x32xf32>
    %18 = tpu.matmul %16, %17, %cst_12 {dimension_numbers = #tpu.dot_dimension_numbers<[1], [0], [0], [1], [0, 0, 1, 1], [], []>} : vector<16x32xbf16>, vector<32x32xbf16>, vector<16x32xf32> -> vector<16x32xf32>
    %c0_13 = arith.constant 0 : index
    %c0_14 = arith.constant 0 : index
    %19 = vector.load %arg7[%c0_13, %c0_14] : memref<1x32xf32, #tpu.memory_space<vmem>>, vector<1x32xf32>
    %20 = vector.broadcast %19 : vector<1x32xf32> to vector<16x32xf32>
    %21 = arith.addf %18, %20 : vector<16x32xf32>
    %cst_15 = arith.constant 0.000000e+00 : f32
    %22 = vector.broadcast %cst_15 : f32 to vector<16x32xf32>
    %23 = arith.maximumf %21, %22 : vector<16x32xf32>
    %24 = arith.truncf %23 : vector<16x32xf32> to vector<16x32xbf16>
    %c0_16 = arith.constant 0 : index
    %c0_17 = arith.constant 0 : index
    %25 = vector.load %arg8[%c0_16, %c0_17] : memref<32x32xbf16, #tpu.memory_space<vmem>>, vector<32x32xbf16>
    %cst_18 = arith.constant dense<0.000000e+00> : vector<16x32xf32>
    %26 = tpu.matmul %24, %25, %cst_18 {dimension_numbers = #tpu.dot_dimension_numbers<[1], [0], [0], [1], [0, 0, 1, 1], [], []>} : vector<16x32xbf16>, vector<32x32xbf16>, vector<16x32xf32> -> vector<16x32xf32>
    %c0_19 = arith.constant 0 : index
    %c0_20 = arith.constant 0 : index
    %27 = vector.load %arg9[%c0_19, %c0_20] : memref<1x32xf32, #tpu.memory_space<vmem>>, vector<1x32xf32>
    %28 = vector.broadcast %27 : vector<1x32xf32> to vector<16x32xf32>
    %29 = arith.addf %26, %28 : vector<16x32xf32>
    %cst_21 = arith.constant 0.000000e+00 : f32
    %30 = vector.broadcast %cst_21 : f32 to vector<16x32xf32>
    %31 = arith.cmpf ogt, %29, %30 : vector<16x32xf32>
    %32 = math.exp %29 : vector<16x32xf32>
    %cst_22 = arith.constant 1.000000e+00 : f32
    %33 = vector.broadcast %cst_22 : f32 to vector<16x32xf32>
    %34 = arith.subf %32, %33 : vector<16x32xf32>
    %35 = arith.select %31, %29, %34 : vector<16x32xi1>, vector<16x32xf32>
    %36 = vector.shape_cast %35 : vector<16x32xf32> to vector<1x16x32xf32>
    %cst_23 = arith.constant dense<0.000000e+00> : vector<1xf32>
    %37 = vector.multi_reduction <add>, %36, %cst_23 [1, 2] : vector<1x16x32xf32> to vector<1xf32>
    %38 = vector.shape_cast %37 : vector<1xf32> to vector<1x1x1xf32>
    %39 = vector.extract %38[0, 0, 0] : f32 from vector<1x1x1xf32>
    %40 = arith.mulf %35, %35 : vector<16x32xf32>
    %41 = vector.shape_cast %40 : vector<16x32xf32> to vector<1x16x32xf32>
    %cst_24 = arith.constant dense<0.000000e+00> : vector<1xf32>
    %42 = vector.multi_reduction <add>, %41, %cst_24 [1, 2] : vector<1x16x32xf32> to vector<1xf32>
    %43 = vector.shape_cast %42 : vector<1xf32> to vector<1x1x1xf32>
    %44 = vector.extract %43[0, 0, 0] : f32 from vector<1x1x1xf32>
    %cst_25 = arith.constant 5.120000e+02 : f32
    %45 = arith.divf %39, %cst_25 : f32
    %cst_26 = arith.constant 5.120000e+02 : f32
    %46 = arith.divf %44, %cst_26 : f32
    %47 = arith.mulf %45, %45 : f32
    %48 = arith.subf %46, %47 : f32
    %cst_27 = arith.constant 0.000000e+00 : f32
    %49 = arith.maximumf %48, %cst_27 : f32
    %50 = vector.broadcast %45 : f32 to vector<16x32xf32>
    %51 = arith.subf %35, %50 : vector<16x32xf32>
    %cst_28 = arith.constant 9.99999974E-6 : f32
    %52 = arith.addf %49, %cst_28 : f32
    %53 = math.rsqrt %52 : f32
    %54 = vector.broadcast %53 : f32 to vector<16x32xf32>
    %55 = arith.mulf %51, %54 : vector<16x32xf32>
    %56 = arith.truncf %55 : vector<16x32xf32> to vector<16x32xbf16>
    %cst_29 = arith.constant dense<0.000000e+00> : vector<16x32xf32>
    %57 = tpu.matmul %0, %56, %cst_29 {dimension_numbers = #tpu.dot_dimension_numbers<[1], [0], [0], [1], [0, 0, 1, 1], [], []>} : vector<16x16xbf16>, vector<16x32xbf16>, vector<16x32xf32> -> vector<16x32xf32>
    %58 = arith.addf %55, %57 : vector<16x32xf32>
    %59 = arith.truncf %58 : vector<16x32xf32> to vector<16x32xbf16>
    %c0_30 = arith.constant 0 : index
    %c0_31 = arith.constant 0 : index
    %60 = vector.load %arg10[%c0_30, %c0_31] : memref<32x32xbf16, #tpu.memory_space<vmem>>, vector<32x32xbf16>
    %cst_32 = arith.constant dense<0.000000e+00> : vector<16x32xf32>
    %61 = tpu.matmul %59, %60, %cst_32 {dimension_numbers = #tpu.dot_dimension_numbers<[1], [0], [0], [1], [0, 0, 1, 1], [], []>} : vector<16x32xbf16>, vector<32x32xbf16>, vector<16x32xf32> -> vector<16x32xf32>
    %c0_33 = arith.constant 0 : index
    %c0_34 = arith.constant 0 : index
    %62 = vector.load %arg11[%c0_33, %c0_34] : memref<1x32xf32, #tpu.memory_space<vmem>>, vector<1x32xf32>
    %63 = vector.broadcast %62 : vector<1x32xf32> to vector<16x32xf32>
    %64 = arith.addf %61, %63 : vector<16x32xf32>
    %cst_35 = arith.constant 0.000000e+00 : f32
    %65 = vector.broadcast %cst_35 : f32 to vector<16x32xf32>
    %66 = arith.maximumf %64, %65 : vector<16x32xf32>
    %67 = arith.truncf %66 : vector<16x32xf32> to vector<16x32xbf16>
    %c0_36 = arith.constant 0 : index
    %c0_37 = arith.constant 0 : index
    %68 = vector.load %arg12[%c0_36, %c0_37] : memref<32x32xbf16, #tpu.memory_space<vmem>>, vector<32x32xbf16>
    %cst_38 = arith.constant dense<0.000000e+00> : vector<16x32xf32>
    %69 = tpu.matmul %67, %68, %cst_38 {dimension_numbers = #tpu.dot_dimension_numbers<[1], [0], [0], [1], [0, 0, 1, 1], [], []>} : vector<16x32xbf16>, vector<32x32xbf16>, vector<16x32xf32> -> vector<16x32xf32>
    %c0_39 = arith.constant 0 : index
    %c0_40 = arith.constant 0 : index
    %70 = vector.load %arg13[%c0_39, %c0_40] : memref<1x32xf32, #tpu.memory_space<vmem>>, vector<1x32xf32>
    %71 = vector.broadcast %70 : vector<1x32xf32> to vector<16x32xf32>
    %72 = arith.addf %69, %71 : vector<16x32xf32>
    %cst_41 = arith.constant 0.000000e+00 : f32
    %73 = vector.broadcast %cst_41 : f32 to vector<16x32xf32>
    %74 = arith.cmpf ogt, %72, %73 : vector<16x32xf32>
    %75 = math.exp %72 : vector<16x32xf32>
    %cst_42 = arith.constant 1.000000e+00 : f32
    %76 = vector.broadcast %cst_42 : f32 to vector<16x32xf32>
    %77 = arith.subf %75, %76 : vector<16x32xf32>
    %78 = arith.select %74, %72, %77 : vector<16x32xi1>, vector<16x32xf32>
    %79 = vector.shape_cast %78 : vector<16x32xf32> to vector<1x16x32xf32>
    %cst_43 = arith.constant dense<0.000000e+00> : vector<1xf32>
    %80 = vector.multi_reduction <add>, %79, %cst_43 [1, 2] : vector<1x16x32xf32> to vector<1xf32>
    %81 = vector.shape_cast %80 : vector<1xf32> to vector<1x1x1xf32>
    %82 = vector.extract %81[0, 0, 0] : f32 from vector<1x1x1xf32>
    %83 = arith.mulf %78, %78 : vector<16x32xf32>
    %84 = vector.shape_cast %83 : vector<16x32xf32> to vector<1x16x32xf32>
    %cst_44 = arith.constant dense<0.000000e+00> : vector<1xf32>
    %85 = vector.multi_reduction <add>, %84, %cst_44 [1, 2] : vector<1x16x32xf32> to vector<1xf32>
    %86 = vector.shape_cast %85 : vector<1xf32> to vector<1x1x1xf32>
    %87 = vector.extract %86[0, 0, 0] : f32 from vector<1x1x1xf32>
    %cst_45 = arith.constant 5.120000e+02 : f32
    %88 = arith.divf %82, %cst_45 : f32
    %cst_46 = arith.constant 5.120000e+02 : f32
    %89 = arith.divf %87, %cst_46 : f32
    %90 = arith.mulf %88, %88 : f32
    %91 = arith.subf %89, %90 : f32
    %cst_47 = arith.constant 0.000000e+00 : f32
    %92 = arith.maximumf %91, %cst_47 : f32
    %93 = vector.broadcast %88 : f32 to vector<16x32xf32>
    %94 = arith.subf %78, %93 : vector<16x32xf32>
    %cst_48 = arith.constant 9.99999974E-6 : f32
    %95 = arith.addf %92, %cst_48 : f32
    %96 = math.rsqrt %95 : f32
    %97 = vector.broadcast %96 : f32 to vector<16x32xf32>
    %98 = arith.mulf %94, %97 : vector<16x32xf32>
    %99 = arith.truncf %98 : vector<16x32xf32> to vector<16x32xbf16>
    %100 = tpu.concatenate %12, %55, %98 in 1 : vector<16x32xf32>, vector<16x32xf32>, vector<16x32xf32> -> vector<16x96xf32>
    %101 = tpu.concatenate %13, %56, %99 in 1 : vector<16x32xbf16>, vector<16x32xbf16>, vector<16x32xbf16> -> vector<16x96xbf16>
    %c0_49 = arith.constant 0 : index
    %c0_50 = arith.constant 0 : index
    %102 = vector.load %arg2[%c0_49, %c0_50] : memref<2x16xbf16, #tpu.memory_space<vmem>>, vector<2x16xbf16>
    %103 = arith.extf %102 : vector<2x16xbf16> to vector<2x16xf32>
    %cst_51 = arith.constant dense<0.000000e+00> : vector<2xf32>
    %104 = vector.multi_reduction <add>, %103, %cst_51 [1] : vector<2x16xf32> to vector<2xf32>
    %105 = vector.shape_cast %104 : vector<2xf32> to vector<2x1xf32>
    %cst_52 = arith.constant 1.000000e+00 : f32
    %106 = vector.broadcast %cst_52 : f32 to vector<2x1xf32>
    %107 = arith.maximumf %105, %106 : vector<2x1xf32>
    %108 = tpu.reciprocal %107 {approx = true} : vector<2x1xf32> -> vector<2x1xf32>
    %c0_53 = arith.constant 0 : index
    %c0_54 = arith.constant 0 : index
    %109 = vector.load %arg3[%c0_53, %c0_54] : memref<16x2xf32, #tpu.memory_space<vmem>>, vector<16x2xf32>
    %110 = vector.extract_strided_slice %109 {offsets = [0, 0], sizes = [16, 1], strides = [1, 1]} : vector<16x2xf32> to vector<16x1xf32>
    %111 = vector.broadcast %110 : vector<16x1xf32> to vector<16x96xf32>
    %112 = arith.addf %100, %111 : vector<16x96xf32>
    %cst_55 = arith.constant dense<0xFF800000> : vector<96xf32>
    %113 = vector.multi_reduction <maximumf>, %112, %cst_55 [0] : vector<16x96xf32> to vector<96xf32>
    %114 = vector.shape_cast %113 : vector<96xf32> to vector<1x96xf32>
    %115 = vector.extract_strided_slice %109 {offsets = [0, 1], sizes = [16, 1], strides = [1, 1]} : vector<16x2xf32> to vector<16x1xf32>
    %116 = vector.broadcast %115 : vector<16x1xf32> to vector<16x96xf32>
    %117 = arith.addf %100, %116 : vector<16x96xf32>
    %cst_56 = arith.constant dense<0xFF800000> : vector<96xf32>
    %118 = vector.multi_reduction <maximumf>, %117, %cst_56 [0] : vector<16x96xf32> to vector<96xf32>
    %119 = vector.shape_cast %118 : vector<96xf32> to vector<1x96xf32>
    %120 = tpu.concatenate %114, %119 in 0 : vector<1x96xf32>, vector<1x96xf32> -> vector<2x96xf32>
    %cst_57 = arith.constant dense<0.000000e+00> : vector<2x96xf32>
    %121 = tpu.matmul %102, %101, %cst_57 {dimension_numbers = #tpu.dot_dimension_numbers<[1], [0], [0], [1], [0, 0, 1, 1], [], []>} : vector<2x16xbf16>, vector<16x96xbf16>, vector<2x96xf32> -> vector<2x96xf32>
    %122 = vector.broadcast %108 : vector<2x1xf32> to vector<2x96xf32>
    %123 = arith.mulf %121, %122 : vector<2x96xf32>
    %124 = tpu.concatenate %120, %123 in 1 : vector<2x96xf32>, vector<2x96xf32> -> vector<2x192xf32>
    %125 = arith.truncf %124 : vector<2x192xf32> to vector<2x192xbf16>
    %c0_58 = arith.constant 0 : index
    %c0_59 = arith.constant 0 : index
    %126 = vector.load %arg14[%c0_58, %c0_59] : memref<192x32xbf16, #tpu.memory_space<vmem>>, vector<192x32xbf16>
    %cst_60 = arith.constant dense<0.000000e+00> : vector<2x32xf32>
    %127 = tpu.matmul %125, %126, %cst_60 {dimension_numbers = #tpu.dot_dimension_numbers<[1], [0], [0], [1], [0, 0, 1, 1], [], []>} : vector<2x192xbf16>, vector<192x32xbf16>, vector<2x32xf32> -> vector<2x32xf32>
    %c0_61 = arith.constant 0 : index
    %c0_62 = arith.constant 0 : index
    %128 = vector.load %arg15[%c0_61, %c0_62] : memref<1x32xf32, #tpu.memory_space<vmem>>, vector<1x32xf32>
    %129 = vector.broadcast %128 : vector<1x32xf32> to vector<2x32xf32>
    %130 = arith.addf %127, %129 : vector<2x32xf32>
    %cst_63 = arith.constant 0.000000e+00 : f32
    %131 = vector.broadcast %cst_63 : f32 to vector<2x32xf32>
    %132 = arith.cmpf ogt, %130, %131 : vector<2x32xf32>
    %133 = math.exp %130 : vector<2x32xf32>
    %cst_64 = arith.constant 1.000000e+00 : f32
    %134 = vector.broadcast %cst_64 : f32 to vector<2x32xf32>
    %135 = arith.subf %133, %134 : vector<2x32xf32>
    %136 = arith.select %132, %130, %135 : vector<2x32xi1>, vector<2x32xf32>
    %c0_65 = arith.constant 0 : index
    %c0_66 = arith.constant 0 : index
    %137 = vector.load %arg19[%c0_65, %c0_66] : memref<2x32xf32, #tpu.memory_space<vmem>>, vector<2x32xf32>
    tpu.vector_store %arg19[%c0_65, %c0_66], %136 {strides = array<i32>} : memref<2x32xf32, #tpu.memory_space<vmem>>, vector<2x32xf32>,
    %138 = arith.truncf %136 : vector<2x32xf32> to vector<2x32xbf16>
    %c0_67 = arith.constant 0 : index
    %c0_68 = arith.constant 0 : index
    %139 = vector.load %arg16[%c0_67, %c0_68] : memref<32x4xbf16, #tpu.memory_space<vmem>>, vector<32x4xbf16>
    %cst_69 = arith.constant dense<0.000000e+00> : vector<2x4xf32>
    %140 = tpu.matmul %138, %139, %cst_69 {dimension_numbers = #tpu.dot_dimension_numbers<[1], [0], [0], [1], [0, 0, 1, 1], [], []>} : vector<2x32xbf16>, vector<32x4xbf16>, vector<2x4xf32> -> vector<2x4xf32>
    %c0_70 = arith.constant 0 : index
    %c0_71 = arith.constant 0 : index
    %141 = vector.load %arg17[%c0_70, %c0_71] : memref<1x4xf32, #tpu.memory_space<vmem>>, vector<1x4xf32>
    %142 = vector.broadcast %141 : vector<1x4xf32> to vector<2x4xf32>
    %143 = arith.addf %140, %142 : vector<2x4xf32>
    %cst_72 = arith.constant dense<0xFF800000> : vector<2xf32>
    %144 = vector.multi_reduction <maximumf>, %143, %cst_72 [1] : vector<2x4xf32> to vector<2xf32>
    %145 = vector.shape_cast %144 : vector<2xf32> to vector<2x1xf32>
    %146 = vector.broadcast %145 : vector<2x1xf32> to vector<2x4xf32>
    %147 = arith.subf %143, %146 : vector<2x4xf32>
    %148 = math.exp %147 : vector<2x4xf32>
    %cst_73 = arith.constant dense<0.000000e+00> : vector<2xf32>
    %149 = vector.multi_reduction <add>, %148, %cst_73 [1] : vector<2x4xf32> to vector<2xf32>
    %150 = vector.shape_cast %149 : vector<2xf32> to vector<2x1xf32>
    %151 = math.log %150 : vector<2x1xf32>
    %152 = vector.broadcast %151 : vector<2x1xf32> to vector<2x4xf32>
    %153 = arith.subf %147, %152 : vector<2x4xf32>
    %c0_74 = arith.constant 0 : index
    %c0_75 = arith.constant 0 : index
    %154 = vector.load %arg18[%c0_74, %c0_75] : memref<2x4xf32, #tpu.memory_space<vmem>>, vector<2x4xf32>
    tpu.vector_store %arg18[%c0_74, %c0_75], %153 {strides = array<i32>} : memref<2x4xf32, #tpu.memory_space<vmem>>, vector<2x4xf32>,
    return
  }
}

</mosaic_0001>

<llo_original>
// kernel: gencoder_forward.1
$region0: #{gencoder_forward.1}
  #allocation0 [shape = 'u32[]', space=smem, size = 0x4, offset = 0x4, fixed_abs, tag = 'smem constant byte address 0x4 - core index']
  #allocation1 [shape = 'u32[144,128]{1,0:T(1,128)}', space=vmem, size = 0x12000, scoped, tag = 'internal scratch']
  %s0 = inlined_call_operand.vmem [shape: bf16[16,8], index: 0, kind: input, shape index: {}]
  %s1 = inlined_call_operand.vmem [shape: bf16[16,16], index: 1, kind: input, shape index: {}]
  %s2 = inlined_call_operand.vmem [shape: bf16[2,16], index: 2, kind: input, shape index: {}]
  %s3 = inlined_call_operand.vmem [shape: f32[16,2], index: 3, kind: input, shape index: {}]
  %s4 = inlined_call_operand.vmem [shape: bf16[8,32], index: 4, kind: input, shape index: {}]
  %s5 = inlined_call_operand.vmem [shape: f32[1,32], index: 5, kind: input, shape index: {}]
  %s6 = inlined_call_operand.vmem [shape: bf16[32,32], index: 6, kind: input, shape index: {}]
  %s7 = inlined_call_operand.vmem [shape: f32[1,32], index: 7, kind: input, shape index: {}]
  %s8 = inlined_call_operand.vmem [shape: bf16[32,32], index: 8, kind: input, shape index: {}]
  %s9 = inlined_call_operand.vmem [shape: f32[1,32], index: 9, kind: input, shape index: {}]
  %s10 = inlined_call_operand.vmem [shape: bf16[32,32], index: 10, kind: input, shape index: {}]
  %s11 = inlined_call_operand.vmem [shape: f32[1,32], index: 11, kind: input, shape index: {}]
  %s12 = inlined_call_operand.vmem [shape: bf16[32,32], index: 12, kind: input, shape index: {}]
  %s13 = inlined_call_operand.vmem [shape: f32[1,32], index: 13, kind: input, shape index: {}]
  %s14 = inlined_call_operand.vmem [shape: bf16[192,32], index: 14, kind: input, shape index: {}]
  %s15 = inlined_call_operand.vmem [shape: f32[1,32], index: 15, kind: input, shape index: {}]
  %s16 = inlined_call_operand.vmem [shape: bf16[32,4], index: 16, kind: input, shape index: {}]
  %s17 = inlined_call_operand.vmem [shape: f32[1,4], index: 17, kind: input, shape index: {}]
  %s18 = inlined_call_operand.hbm [shape: f32[2,4], index: 18, kind: output, shape index: {0}]
  %s19 = inlined_call_operand.hbm [shape: f32[2,32], index: 19, kind: output, shape index: {1}]
  %20 = xla_tuple %s18, %s19
  %s21 = sld [smem:[#allocation0]]
  $region90: #{gencoder_forward.1} parent=0
    _
  %s23 = ssub.s32 1, %s21
  %s24 = scalar_select 0, %s23, %s21
  $region1: #{gencoder_forward.1} parent=0
    #allocation2 [shape = 'u8[1024]{0}', space=vmem, size = 0x400, scoped, tag = 'output window, operand 0, single buffered']
    #allocation3 [shape = 's32[1]{0}', space=sflag, size = 0x4, scoped, tag = 'scoped memory for gencoder_forward.1']
    #allocation4 [shape = 'u8[1024]{0}', space=vmem, size = 0x400, scoped, tag = 'output window, operand 1, single buffered']
    #allocation5 [shape = 's32[1]{0}', space=sflag, size = 0x4, scoped, tag = 'scoped memory for gencoder_forward.1']
    %25 = vsyncpa [#allocation3], 0
    %26 = vsyncpa [#allocation5], 0
    // Predicated region
    $region2: #{gencoder_forward.1} parent=1 // pred_check
      _
    $region3: #{gencoder_forward.1} parent=1 // pred_check_branch
      %28 = sbr.rel (0) target = $region5
    $region4: #{gencoder_forward.1} parent=1 // pred_region
      _
    $region5: #{gencoder_forward.1} parent=1 // pred_fallthru
      _
    // Predicated region
    $region6: #{gencoder_forward.1} parent=1 // pred_check
      _
    $region7: #{gencoder_forward.1} parent=1 // pred_check_branch
      %30 = sbr.rel (0) target = $region9
    $region8: #{gencoder_forward.1} parent=1 // pred_region
      _
    $region9: #{gencoder_forward.1} parent=1 // pred_fallthru
      _
    // Predicated region
    $region10: #{gencoder_forward.1} parent=1 // pred_check
      _
    $region11: #{gencoder_forward.1} parent=1 // pred_check_branch
      %32 = sbr.rel (0) target = $region13
    $region12: #{gencoder_forward.1} parent=1 // pred_region
      _
    $region13: #{gencoder_forward.1} parent=1 // pred_fallthru
      _
    // Predicated region
    $region14: #{gencoder_forward.1} parent=1 // pred_check
      _
    $region15: #{gencoder_forward.1} parent=1 // pred_check_branch
      %34 = sbr.rel (0) target = $region17
    $region16: #{gencoder_forward.1} parent=1 // pred_region
      _
    $region17: #{gencoder_forward.1} parent=1 // pred_fallthru
      _
    // Predicated region
    $region18: #{gencoder_forward.1} parent=1 // pred_check
      _
    $region19: #{gencoder_forward.1} parent=1 // pred_check_branch
      %36 = sbr.rel (0) target = $region21
    $region20: #{gencoder_forward.1} parent=1 // pred_region
      _
    $region21: #{gencoder_forward.1} parent=1 // pred_fallthru
      _
    // Predicated region
    $region22: #{gencoder_forward.1} parent=1 // pred_check
      _
    $region23: #{gencoder_forward.1} parent=1 // pred_check_branch
      %38 = sbr.rel (0) target = $region25
    $region24: #{gencoder_forward.1} parent=1 // pred_region
      _
    $region25: #{gencoder_forward.1} parent=1 // pred_fallthru
      _
    // Predicated region
    $region26: #{gencoder_forward.1} parent=1 // pred_check
      _
    $region27: #{gencoder_forward.1} parent=1 // pred_check_branch
      %40 = sbr.rel (0) target = $region29
    $region28: #{gencoder_forward.1} parent=1 // pred_region
      _
    $region29: #{gencoder_forward.1} parent=1 // pred_fallthru
      _
    // Predicated region
    $region30: #{gencoder_forward.1} parent=1 // pred_check
      _
    $region31: #{gencoder_forward.1} parent=1 // pred_check_branch
      %42 = sbr.rel (0) target = $region33
    $region32: #{gencoder_forward.1} parent=1 // pred_region
      _
    $region33: #{gencoder_forward.1} parent=1 // pred_fallthru
      _
    // Predicated region
    $region34: #{gencoder_forward.1} parent=1 // pred_check
      _
    $region35: #{gencoder_forward.1} parent=1 // pred_check_branch
      %44 = sbr.rel (0) target = $region37
    $region36: #{gencoder_forward.1} parent=1 // pred_region
      _
    $region37: #{gencoder_forward.1} parent=1 // pred_fallthru
      _
    // Predicated region
    $region38: #{gencoder_forward.1} parent=1 // pred_check
      _
    $region39: #{gencoder_forward.1} parent=1 // pred_check_branch
      %46 = sbr.rel (0) target = $region41
    $region40: #{gencoder_forward.1} parent=1 // pred_region
      _
    $region41: #{gencoder_forward.1} parent=1 // pred_fallthru
      _
    // Predicated region
    $region42: #{gencoder_forward.1} parent=1 // pred_check
      _
    $region43: #{gencoder_forward.1} parent=1 // pred_check_branch
      %48 = sbr.rel (0) target = $region45
    $region44: #{gencoder_forward.1} parent=1 // pred_region
      _
    $region45: #{gencoder_forward.1} parent=1 // pred_fallthru
      _
    // Predicated region
    $region46: #{gencoder_forward.1} parent=1 // pred_check
      _
    $region47: #{gencoder_forward.1} parent=1 // pred_check_branch
      %50 = sbr.rel (0) target = $region49
    $region48: #{gencoder_forward.1} parent=1 // pred_region
      _
    $region49: #{gencoder_forward.1} parent=1 // pred_fallthru
      _
    // Predicated region
    $region50: #{gencoder_forward.1} parent=1 // pred_check
      _
    $region51: #{gencoder_forward.1} parent=1 // pred_check_branch
      %52 = sbr.rel (0) target = $region53
    $region52: #{gencoder_forward.1} parent=1 // pred_region
      _
    $region53: #{gencoder_forward.1} parent=1 // pred_fallthru
      _
    // Predicated region
    $region54: #{gencoder_forward.1} parent=1 // pred_check
      _
    $region55: #{gencoder_forward.1} parent=1 // pred_check_branch
      %54 = sbr.rel (0) target = $region57
    $region56: #{gencoder_forward.1} parent=1 // pred_region
      _
    $region57: #{gencoder_forward.1} parent=1 // pred_fallthru
      _
    // Predicated region
    $region58: #{gencoder_forward.1} parent=1 // pred_check
      _
    $region59: #{gencoder_forward.1} parent=1 // pred_check_branch
      %56 = sbr.rel (0) target = $region61
    $region60: #{gencoder_forward.1} parent=1 // pred_region
      _
    $region61: #{gencoder_forward.1} parent=1 // pred_fallthru
      _
    // Predicated region
    $region62: #{gencoder_forward.1} parent=1 // pred_check
      _
    $region63: #{gencoder_forward.1} parent=1 // pred_check_branch
      %58 = sbr.rel (0) target = $region65
    $region64: #{gencoder_forward.1} parent=1 // pred_region
      _
    $region65: #{gencoder_forward.1} parent=1 // pred_fallthru
      _
    // Predicated region
    $region66: #{gencoder_forward.1} parent=1 // pred_check
      _
    $region67: #{gencoder_forward.1} parent=1 // pred_check_branch
      %60 = sbr.rel (0) target = $region69
    $region68: #{gencoder_forward.1} parent=1 // pred_region
      _
    $region69: #{gencoder_forward.1} parent=1 // pred_fallthru
      _
    // Predicated region
    $region70: #{gencoder_forward.1} parent=1 // pred_check
      _
    $region71: #{gencoder_forward.1} parent=1 // pred_check_branch
      %62 = sbr.rel (0) target = $region73
    $region72: #{gencoder_forward.1} parent=1 // pred_region
      _
    $region73: #{gencoder_forward.1} parent=1 // pred_fallthru
      _
    %v64 = vld [vmem:[%s1] sm:$0xf]
    %v65 = vld [vmem:[%s1 + $0x4] sm:$0xf]
    %v66 = vld [vmem:[%s0] sm:$0xf]
    %v67 = vld [vmem:[%s0 + $0x4] sm:$0xf]
    %v68 = vld [vmem:[%s4] sm:$0xf]
    %v69 = vld [vmem:[%s5] sm:$0x1]
    %v71 = vlaneseq
    %v72 = vshrl.u32 %v71, 7
    %v73 = vsub.s32 0, %v72
    %v74 = vrot.slane %v69, %v73
    %v78 = vunpack.c.l.b16 %v66
    %v79 = vunpack.c.l.b16 %v67
    %v80 = vpack.c.b16 %v79, %v78
    %vm81 = vcmask 64512
    %v83 = vsel %vm81, %v80, 0
    %vm85 = vcmask 1043456
    %v87 = vsel %vm85, %v68, 0
    %89 = vmatprep.subr.bf16.mxu0 0
    %90 = vmatpush1.bf16.msra.mxu0 0
    %91 = vmatprep.subr.bf16.mxu0 0
    %92 = vmatpush1.bf16.msra.mxu0 0
    %93 = vmatprep.subr.bf16.mxu0 0
    %94 = vmatpush1.bf16.msra.mxu0 0
    %95 = vmatprep.subr.bf16.mxu0 0
    %96 = vmatpush1.bf16.msra.mxu0 0
    %97 = vmatprep.subr.bf16.mxu0 0
    %98 = vmatpush1.bf16.msra.mxu0 0
    %99 = vmatprep.subr.bf16.mxu0 0
    %100 = vmatpush1.bf16.msra.mxu0 0
    %101 = vmatprep.subr.bf16.mxu0 0
    %102 = vmatpush1.bf16.msra.mxu0 0
    %103 = vmatprep.subr.bf16.mxu0 0
    %104 = vmatpush1.bf16.msra.mxu0 %v87
    %105 = vmatprep.subr.bf16.mxu0 0
    %106 = vmatpush2.bf16.msra.mxu0 0
    %107 = vmatprep.subr.bf16.mxu0 0
    %108 = vmatpush2.bf16.msra.mxu0 0
    %109 = vmatprep.subr.bf16.mxu0 0
    %110 = vmatpush2.bf16.msra.mxu0 0
    %111 = vmatprep.subr.bf16.mxu0 0
    %112 = vmatpush2.bf16.msra.mxu0 0
    %113 = vmatprep.subr.bf16.mxu0 0
    %114 = vmatpush2.bf16.msra.mxu0 0
    %115 = vmatprep.subr.bf16.mxu0 0
    %116 = vmatpush2.bf16.msra.mxu0 0
    %117 = vmatprep.subr.bf16.mxu0 0
    %118 = vmatpush2.bf16.msra.mxu0 0
    %119 = vmatprep.subr.bf16.mxu0 0
    %120 = vmatpush2.bf16.msra.mxu0 0
    %121 = vmatprep.mubr.bf16.mxu0 0
    %122 = vmatmul.mubr.bf16.gmra.mxu0 %v83
    %v123 = vpop.f32.mrf.mxu0
    %v124 = vadd.f32 %v74, %v123
    %v125 = vpop.f32.mrf.mxu0
    %v126 = vpop.f32.mrf.mxu0
    %v127 = vadd.f32 %v74, %v126
    %v128 = vpop.f32.mrf.mxu0
    %129 = vdwg.mxu0
    %vm130 = vcmp.gt.f32.partialorder %v124, 0.0
    %vm131 = vcmp.gt.f32.partialorder %v127, 0.0
    %v132 = vmul.f32 %v124, 1.442695
    %v133 = vpow.pop %v132
    %v134 = vmul.f32 %v127, 1.442695
    %v135 = vpow.pop %v134
    %v136 = vsub.f32 %v133, 1.0
    %v137 = vsub.f32 %v135, 1.0
    %v138 = vsel %vm130, %v124, %v136
    %v139 = vsel %vm131, %v127, %v137
    %v140 = vpack.c.bf16 %v139, %v138
    %v143 = vunpack.c.l.b16 %v64
    %v144 = vunpack.c.l.b16 %v65
    %v145 = vpack.c.b16 %v144, %v143
    %vm146 = vcmask 130048
    %v148 = vsel %vm146, %v145, 0
    %150 = vmatprep.subr.bf16.mxu0 0
    %151 = vmatpush1.bf16.msra.mxu0 0
    %152 = vmatprep.subr.bf16.mxu0 0
    %153 = vmatpush1.bf16.msra.mxu0 0
    %154 = vmatprep.subr.bf16.mxu0 0
    %155 = vmatpush1.bf16.msra.mxu0 0
    %156 = vmatprep.subr.bf16.mxu0 0
    %157 = vmatpush1.bf16.msra.mxu0 0
    %158 = vmatprep.subr.bf16.mxu0 0
    %159 = vmatpush1.bf16.msra.mxu0 0
    %160 = vmatprep.subr.bf16.mxu0 0
    %161 = vmatpush1.bf16.msra.mxu0 0
    %162 = vmatprep.subr.bf16.mxu0 0
    %163 = vmatpush1.bf16.msra.mxu0 0
    %164 = vmatprep.subr.bf16.mxu0 0
    %165 = vmatpush1.bf16.msra.mxu0 %v140
    %166 = vmatprep.subr.bf16.mxu0 0
    %167 = vmatpush2.bf16.msra.mxu0 0
    %168 = vmatprep.subr.bf16.mxu0 0
    %169 = vmatpush2.bf16.msra.mxu0 0
    %170 = vmatprep.subr.bf16.mxu0 0
    %171 = vmatpush2.bf16.msra.mxu0 0
    %172 = vmatprep.subr.bf16.mxu0 0
    %173 = vmatpush2.bf16.msra.mxu0 0
    %174 = vmatprep.subr.bf16.mxu0 0
    %175 = vmatpush2.bf16.msra.mxu0 0
    %176 = vmatprep.subr.bf16.mxu0 0
    %177 = vmatpush2.bf16.msra.mxu0 0
    %178 = vmatprep.subr.bf16.mxu0 0
    %179 = vmatpush2.bf16.msra.mxu0 0
    %180 = vmatprep.subr.bf16.mxu0 0
    %181 = vmatpush2.bf16.msra.mxu0 0
    %182 = vmatprep.mubr.bf16.mxu0 0
    %183 = vmatmul.mubr.bf16.gmra.mxu0 %v148
    %v184 = vpop.f32.mrf.mxu0
    %v185 = vadd.f32 0.0, %v184
    %v186 = vpop.f32.mrf.mxu0
    %v187 = vpop.f32.mrf.mxu0
    %v188 = vadd.f32 0.0, %v187
    %v189 = vpop.f32.mrf.mxu0
    %190 = vdwg.mxu0
    %v191 = vadd.f32 %v138, %v185
    %v192 = vadd.f32 %v139, %v188
    %v193 = vpack.c.bf16 %v192, %v191
    %v194 = vld [vmem:[%s6] sm:$0xf]
    %v195 = vld [vmem:[%s6 + $0x4] sm:$0xf]
    %v196 = vld [vmem:[%s6 + $0x8] sm:$0xf]
    %v197 = vld [vmem:[%s6 + $0xc] sm:$0xf]
    %v198 = vld [vmem:[%s7] sm:$0x1]
    %v200 = vlaneseq
    %v201 = vshrl.u32 %v200, 7
    %v202 = vsub.s32 0, %v201
    %v203 = vrot.slane %v198, %v202
    %v209 = vunpack.c.l.b16 %v194
    %v210 = vunpack.c.l.b16 %v195
    %v211 = vunpack.c.l.b16 %v196
    %v212 = vunpack.c.l.b16 %v197
    %v213 = vpack.c.b16 %v210, %v209
    %v214 = vpack.c.b16 %v212, %v211
    %vm217 = vcmask 261120
    %v219 = vsel %vm217, %v193, 0
    %221 = vmatprep.subr.bf16.mxu0 0
    %222 = vmatpush1.bf16.msra.mxu0 0
    %223 = vmatprep.subr.bf16.mxu0 0
    %224 = vmatpush1.bf16.msra.mxu0 0
    %225 = vmatprep.subr.bf16.mxu0 0
    %226 = vmatpush1.bf16.msra.mxu0 0
    %227 = vmatprep.subr.bf16.mxu0 0
    %228 = vmatpush1.bf16.msra.mxu0 0
    %229 = vmatprep.subr.bf16.mxu0 0
    %230 = vmatpush1.bf16.msra.mxu0 0
    %231 = vmatprep.subr.bf16.mxu0 0
    %232 = vmatpush1.bf16.msra.mxu0 0
    %233 = vmatprep.subr.bf16.mxu0 0
    %234 = vmatpush1.bf16.msra.mxu0 %v214
    %235 = vmatprep.subr.bf16.mxu0 0
    %236 = vmatpush1.bf16.msra.mxu0 %v213
    %237 = vmatprep.subr.bf16.mxu0 0
    %238 = vmatpush2.bf16.msra.mxu0 0
    %239 = vmatprep.subr.bf16.mxu0 0
    %240 = vmatpush2.bf16.msra.mxu0 0
    %241 = vmatprep.subr.bf16.mxu0 0
    %242 = vmatpush2.bf16.msra.mxu0 0
    %243 = vmatprep.subr.bf16.mxu0 0
    %244 = vmatpush2.bf16.msra.mxu0 0
    %245 = vmatprep.subr.bf16.mxu0 0
    %246 = vmatpush2.bf16.msra.mxu0 0
    %247 = vmatprep.subr.bf16.mxu0 0
    %248 = vmatpush2.bf16.msra.mxu0 0
    %249 = vmatprep.subr.bf16.mxu0 0
    %250 = vmatpush2.bf16.msra.mxu0 0
    %251 = vmatprep.subr.bf16.mxu0 0
    %252 = vmatpush2.bf16.msra.mxu0 0
    %253 = vmatprep.mubr.bf16.mxu0 0
    %254 = vmatmul.mubr.bf16.gmra.mxu0 %v219
    %v255 = vpop.f32.mrf.mxu0
    %v256 = vadd.f32 %v203, %v255
    %v257 = vpop.f32.mrf.mxu0
    %v258 = vpop.f32.mrf.mxu0
    %v259 = vadd.f32 %v203, %v258
    %v260 = vpop.f32.mrf.mxu0
    %261 = vdwg.mxu0
    %v262 = vmax.f32 %v256, 0.0
    %v263 = vmax.f32 %v259, 0.0
    %v264 = vpack.c.bf16 %v263, %v262
    %v265 = vld [vmem:[%s8] sm:$0xf]
    %v266 = vld [vmem:[%s8 + $0x4] sm:$0xf]
    %v267 = vld [vmem:[%s8 + $0x8] sm:$0xf]
    %v268 = vld [vmem:[%s8 + $0xc] sm:$0xf]
    %v269 = vld [vmem:[%s9] sm:$0x1]
    %v271 = vlaneseq
    %v272 = vshrl.u32 %v271, 7
    %v273 = vsub.s32 0, %v272
    %v274 = vrot.slane %v269, %v273
    %v280 = vunpack.c.l.b16 %v265
    %v281 = vunpack.c.l.b16 %v266
    %v282 = vunpack.c.l.b16 %v267
    %v283 = vunpack.c.l.b16 %v268
    %v284 = vpack.c.b16 %v281, %v280
    %v285 = vpack.c.b16 %v283, %v282
    %v289 = vsel %vm217, %v264, 0
    %291 = vmatprep.subr.bf16.mxu0 0
    %292 = vmatpush1.bf16.msra.mxu0 0
    %293 = vmatprep.subr.bf16.mxu0 0
    %294 = vmatpush1.bf16.msra.mxu0 0
    %295 = vmatprep.subr.bf16.mxu0 0
    %296 = vmatpush1.bf16.msra.mxu0 0
    %297 = vmatprep.subr.bf16.mxu0 0
    %298 = vmatpush1.bf16.msra.mxu0 0
    %299 = vmatprep.subr.bf16.mxu0 0
    %300 = vmatpush1.bf16.msra.mxu0 0
    %301 = vmatprep.subr.bf16.mxu0 0
    %302 = vmatpush1.bf16.msra.mxu0 0
    %303 = vmatprep.subr.bf16.mxu0 0
    %304 = vmatpush1.bf16.msra.mxu0 %v285
    %305 = vmatprep.subr.bf16.mxu0 0
    %306 = vmatpush1.bf16.msra.mxu0 %v284
    %307 = vmatprep.subr.bf16.mxu0 0
    %308 = vmatpush2.bf16.msra.mxu0 0
    %309 = vmatprep.subr.bf16.mxu0 0
    %310 = vmatpush2.bf16.msra.mxu0 0
    %311 = vmatprep.subr.bf16.mxu0 0
    %312 = vmatpush2.bf16.msra.mxu0 0
    %313 = vmatprep.subr.bf16.mxu0 0
    %314 = vmatpush2.bf16.msra.mxu0 0
    %315 = vmatprep.subr.bf16.mxu0 0
    %316 = vmatpush2.bf16.msra.mxu0 0
    %317 = vmatprep.subr.bf16.mxu0 0
    %318 = vmatpush2.bf16.msra.mxu0 0
    %319 = vmatprep.subr.bf16.mxu0 0
    %320 = vmatpush2.bf16.msra.mxu0 0
    %321 = vmatprep.subr.bf16.mxu0 0
    %322 = vmatpush2.bf16.msra.mxu0 0
    %323 = vmatprep.mubr.bf16.mxu0 0
    %324 = vmatmul.mubr.bf16.gmra.mxu0 %v289
    %v325 = vpop.f32.mrf.mxu0
    %v326 = vadd.f32 %v274, %v325
    %v327 = vpop.f32.mrf.mxu0
    %v328 = vpop.f32.mrf.mxu0
    %v329 = vadd.f32 %v274, %v328
    %v330 = vpop.f32.mrf.mxu0
    %331 = vdwg.mxu0
    %vm332 = vcmp.gt.f32.partialorder %v326, 0.0
    %vm333 = vcmp.gt.f32.partialorder %v329, 0.0
    %v334 = vmul.f32 %v326, 1.442695
    %v335 = vpow.pop %v334
    %v336 = vmul.f32 %v329, 1.442695
    %v337 = vpow.pop %v336
    %v338 = vsub.f32 %v335, 1.0
    %v339 = vsub.f32 %v337, 1.0
    %v340 = vsel %vm332, %v326, %v338
    %v341 = vsel %vm333, %v329, %v339
    %v342 = vsel %vm217, %v340, 0.0
    %v343 = vsel %vm217, %v341, 0.0
    %v344 = vadd.f32 %v342, %v343
    %345 = vadd.xlane.f32.xlu0 %v344
    %v346 = vpop.xlane.xlu0 %345
    %v347 = vrot.slane %v346, 4
    %v348 = vadd.f32 %v346, %v347
    %v349 = vrot.slane %v348, 2
    %v350 = vadd.f32 %v348, %v349
    %v351 = vrot.slane %v350, 1
    %v352 = vadd.f32 %v350, %v351
    %s353 = vtos %v352
    %v354 = vmul.f32 %v340, %v340
    %v355 = vmul.f32 %v341, %v341
    %v356 = vsel %vm217, %v354, 0.0
    %v357 = vsel %vm217, %v355, 0.0
    %v358 = vadd.f32 %v356, %v357
    %359 = vadd.xlane.f32.xlu0 %v358
    %v360 = vpop.xlane.xlu0 %359
    %v361 = vrot.slane %v360, 4
    %v362 = vadd.f32 %v360, %v361
    %v363 = vrot.slane %v362, 2
    %v364 = vadd.f32 %v362, %v363
    %v365 = vrot.slane %v364, 1
    %v366 = vadd.f32 %v364, %v365
    %s367 = vtos %v366
    %v368 = vrcp.pop 512.0
    %s369 = vtos %v368
    %s370 = smul.f32 %s353, %s369
    %v371 = vrcp.pop 512.0
    %s372 = vtos %v371
    %s373 = smul.f32 %s367, %s372
    %s374 = smul.f32 %s370, %s370
    %s375 = ssub.f32 %s373, %s374
    %s376 = smax.f32 %s375, 0.0
    %v377 = vstv %s370
    %v378 = vsub.f32 %v340, %v377
    %v379 = vsub.f32 %v341, %v377
    %s380 = sadd.f32 %s376, 1e-05
    %v381 = vstv %s380
    %v382 = vrsqrt.pop %v381
    %s383 = vtos %v382
    %v384 = vstv %s383
    %v385 = vmul.f32 %v378, %v384
    %v386 = vmul.f32 %v379, %v384
    %v387 = vpack.c.bf16 %v386, %v385
    %388 = vmatprep.subr.bf16.mxu0 0
    %389 = vmatpush1.bf16.msra.mxu0 0
    %390 = vmatprep.subr.bf16.mxu0 0
    %391 = vmatpush1.bf16.msra.mxu0 0
    %392 = vmatprep.subr.bf16.mxu0 0
    %393 = vmatpush1.bf16.msra.mxu0 0
    %394 = vmatprep.subr.bf16.mxu0 0
    %395 = vmatpush1.bf16.msra.mxu0 0
    %396 = vmatprep.subr.bf16.mxu0 0
    %397 = vmatpush1.bf16.msra.mxu0 0
    %398 = vmatprep.subr.bf16.mxu0 0
    %399 = vmatpush1.bf16.msra.mxu0 0
    %400 = vmatprep.subr.bf16.mxu0 0
    %401 = vmatpush1.bf16.msra.mxu0 0
    %402 = vmatprep.subr.bf16.mxu0 0
    %403 = vmatpush1.bf16.msra.mxu0 %v387
    %404 = vmatprep.subr.bf16.mxu0 0
    %405 = vmatpush2.bf16.msra.mxu0 0
    %406 = vmatprep.subr.bf16.mxu0 0
    %407 = vmatpush2.bf16.msra.mxu0 0
    %408 = vmatprep.subr.bf16.mxu0 0
    %409 = vmatpush2.bf16.msra.mxu0 0
    %410 = vmatprep.subr.bf16.mxu0 0
    %411 = vmatpush2.bf16.msra.mxu0 0
    %412 = vmatprep.subr.bf16.mxu0 0
    %413 = vmatpush2.bf16.msra.mxu0 0
    %414 = vmatprep.subr.bf16.mxu0 0
    %415 = vmatpush2.bf16.msra.mxu0 0
    %416 = vmatprep.subr.bf16.mxu0 0
    %417 = vmatpush2.bf16.msra.mxu0 0
    %418 = vmatprep.subr.bf16.mxu0 0
    %419 = vmatpush2.bf16.msra.mxu0 0
    %420 = vmatprep.mubr.bf16.mxu0 0
    %421 = vmatmul.mubr.bf16.gmra.mxu0 %v148
    %v422 = vpop.f32.mrf.mxu0
    %v423 = vadd.f32 0.0, %v422
    %v424 = vpop.f32.mrf.mxu0
    %v425 = vpop.f32.mrf.mxu0
    %v426 = vadd.f32 0.0, %v425
    %v427 = vpop.f32.mrf.mxu0
    %428 = vdwg.mxu0
    %v429 = vadd.f32 %v385, %v423
    %v430 = vadd.f32 %v386, %v426
    %v431 = vpack.c.bf16 %v430, %v429
    %v432 = vld [vmem:[%s10] sm:$0xf]
    %v433 = vld [vmem:[%s10 + $0x4] sm:$0xf]
    %v434 = vld [vmem:[%s10 + $0x8] sm:$0xf]
    %v435 = vld [vmem:[%s10 + $0xc] sm:$0xf]
    %v436 = vld [vmem:[%s11] sm:$0x1]
    %v438 = vlaneseq
    %v439 = vshrl.u32 %v438, 7
    %v440 = vsub.s32 0, %v439
    %v441 = vrot.slane %v436, %v440
    %v447 = vunpack.c.l.b16 %v432
    %v448 = vunpack.c.l.b16 %v433
    %v449 = vunpack.c.l.b16 %v434
    %v450 = vunpack.c.l.b16 %v435
    %v451 = vpack.c.b16 %v448, %v447
    %v452 = vpack.c.b16 %v450, %v449
    %v456 = vsel %vm217, %v431, 0
    %458 = vmatprep.subr.bf16.mxu0 0
    %459 = vmatpush1.bf16.msra.mxu0 0
    %460 = vmatprep.subr.bf16.mxu0 0
    %461 = vmatpush1.bf16.msra.mxu0 0
    %462 = vmatprep.subr.bf16.mxu0 0
    %463 = vmatpush1.bf16.msra.mxu0 0
    %464 = vmatprep.subr.bf16.mxu0 0
    %465 = vmatpush1.bf16.msra.mxu0 0
    %466 = vmatprep.subr.bf16.mxu0 0
    %467 = vmatpush1.bf16.msra.mxu0 0
    %468 = vmatprep.subr.bf16.mxu0 0
    %469 = vmatpush1.bf16.msra.mxu0 0
    %470 = vmatprep.subr.bf16.mxu0 0
    %471 = vmatpush1.bf16.msra.mxu0 %v452
    %472 = vmatprep.subr.bf16.mxu0 0
    %473 = vmatpush1.bf16.msra.mxu0 %v451
    %474 = vmatprep.subr.bf16.mxu0 0
    %475 = vmatpush2.bf16.msra.mxu0 0
    %476 = vmatprep.subr.bf16.mxu0 0
    %477 = vmatpush2.bf16.msra.mxu0 0
    %478 = vmatprep.subr.bf16.mxu0 0
    %479 = vmatpush2.bf16.msra.mxu0 0
    %480 = vmatprep.subr.bf16.mxu0 0
    %481 = vmatpush2.bf16.msra.mxu0 0
    %482 = vmatprep.subr.bf16.mxu0 0
    %483 = vmatpush2.bf16.msra.mxu0 0
    %484 = vmatprep.subr.bf16.mxu0 0
    %485 = vmatpush2.bf16.msra.mxu0 0
    %486 = vmatprep.subr.bf16.mxu0 0
    %487 = vmatpush2.bf16.msra.mxu0 0
    %488 = vmatprep.subr.bf16.mxu0 0
    %489 = vmatpush2.bf16.msra.mxu0 0
    %490 = vmatprep.mubr.bf16.mxu0 0
    %491 = vmatmul.mubr.bf16.gmra.mxu0 %v456
    %v492 = vpop.f32.mrf.mxu0
    %v493 = vadd.f32 %v441, %v492
    %v494 = vpop.f32.mrf.mxu0
    %v495 = vpop.f32.mrf.mxu0
    %v496 = vadd.f32 %v441, %v495
    %v497 = vpop.f32.mrf.mxu0
    %498 = vdwg.mxu0
    %v499 = vmax.f32 %v493, 0.0
    %v500 = vmax.f32 %v496, 0.0
    %v501 = vpack.c.bf16 %v500, %v499
    %v502 = vld [vmem:[%s12] sm:$0xf]
    %v503 = vld [vmem:[%s12 + $0x4] sm:$0xf]
    %v504 = vld [vmem:[%s12 + $0x8] sm:$0xf]
    %v505 = vld [vmem:[%s12 + $0xc] sm:$0xf]
    %v506 = vld [vmem:[%s13] sm:$0x1]
    %v508 = vlaneseq
    %v509 = vshrl.u32 %v508, 7
    %v510 = vsub.s32 0, %v509
    %v511 = vrot.slane %v506, %v510
    %v517 = vunpack.c.l.b16 %v502
    %v518 = vunpack.c.l.b16 %v503
    %v519 = vunpack.c.l.b16 %v504
    %v520 = vunpack.c.l.b16 %v505
    %v521 = vpack.c.b16 %v518, %v517
    %v522 = vpack.c.b16 %v520, %v519
    %v526 = vsel %vm217, %v501, 0
    %528 = vmatprep.subr.bf16.mxu0 0
    %529 = vmatpush1.bf16.msra.mxu0 0
    %530 = vmatprep.subr.bf16.mxu0 0
    %531 = vmatpush1.bf16.msra.mxu0 0
    %532 = vmatprep.subr.bf16.mxu0 0
    %533 = vmatpush1.bf16.msra.mxu0 0
    %534 = vmatprep.subr.bf16.mxu0 0
    %535 = vmatpush1.bf16.msra.mxu0 0
    %536 = vmatprep.subr.bf16.mxu0 0
    %537 = vmatpush1.bf16.msra.mxu0 0
    %538 = vmatprep.subr.bf16.mxu0 0
    %539 = vmatpush1.bf16.msra.mxu0 0
    %540 = vmatprep.subr.bf16.mxu0 0
    %541 = vmatpush1.bf16.msra.mxu0 %v522
    %542 = vmatprep.subr.bf16.mxu0 0
    %543 = vmatpush1.bf16.msra.mxu0 %v521
    %544 = vmatprep.subr.bf16.mxu0 0
    %545 = vmatpush2.bf16.msra.mxu0 0
    %546 = vmatprep.subr.bf16.mxu0 0
    %547 = vmatpush2.bf16.msra.mxu0 0
    %548 = vmatprep.subr.bf16.mxu0 0
    %549 = vmatpush2.bf16.msra.mxu0 0
    %550 = vmatprep.subr.bf16.mxu0 0
    %551 = vmatpush2.bf16.msra.mxu0 0
    %552 = vmatprep.subr.bf16.mxu0 0
    %553 = vmatpush2.bf16.msra.mxu0 0
    %554 = vmatprep.subr.bf16.mxu0 0
    %555 = vmatpush2.bf16.msra.mxu0 0
    %556 = vmatprep.subr.bf16.mxu0 0
    %557 = vmatpush2.bf16.msra.mxu0 0
    %558 = vmatprep.subr.bf16.mxu0 0
    %559 = vmatpush2.bf16.msra.mxu0 0
    %560 = vmatprep.mubr.bf16.mxu0 0
    %561 = vmatmul.mubr.bf16.gmra.mxu0 %v526
    %v562 = vpop.f32.mrf.mxu0
    %v563 = vadd.f32 %v511, %v562
    %v564 = vpop.f32.mrf.mxu0
    %v565 = vpop.f32.mrf.mxu0
    %v566 = vadd.f32 %v511, %v565
    %v567 = vpop.f32.mrf.mxu0
    %568 = vdwg.mxu0
    %vm569 = vcmp.gt.f32.partialorder %v563, 0.0
    %vm570 = vcmp.gt.f32.partialorder %v566, 0.0
    %v571 = vmul.f32 %v563, 1.442695
    %v572 = vpow.pop %v571
    %v573 = vmul.f32 %v566, 1.442695
    %v574 = vpow.pop %v573
    %v575 = vsub.f32 %v572, 1.0
    %v576 = vsub.f32 %v574, 1.0
    %v577 = vsel %vm569, %v563, %v575
    %v578 = vsel %vm570, %v566, %v576
    %v579 = vsel %vm217, %v577, 0.0
    %v580 = vsel %vm217, %v578, 0.0
    %v581 = vadd.f32 %v579, %v580
    %582 = vadd.xlane.f32.xlu0 %v581
    %v583 = vpop.xlane.xlu0 %582
    %v584 = vrot.slane %v583, 4
    %v585 = vadd.f32 %v583, %v584
    %v586 = vrot.slane %v585, 2
    %v587 = vadd.f32 %v585, %v586
    %v588 = vrot.slane %v587, 1
    %v589 = vadd.f32 %v587, %v588
    %s590 = vtos %v589
    %v591 = vmul.f32 %v577, %v577
    %v592 = vmul.f32 %v578, %v578
    %v593 = vsel %vm217, %v591, 0.0
    %v594 = vsel %vm217, %v592, 0.0
    %v595 = vadd.f32 %v593, %v594
    %596 = vadd.xlane.f32.xlu0 %v595
    %v597 = vpop.xlane.xlu0 %596
    %v598 = vrot.slane %v597, 4
    %v599 = vadd.f32 %v597, %v598
    %v600 = vrot.slane %v599, 2
    %v601 = vadd.f32 %v599, %v600
    %v602 = vrot.slane %v601, 1
    %v603 = vadd.f32 %v601, %v602
    %s604 = vtos %v603
    %v605 = vrcp.pop 512.0
    %s606 = vtos %v605
    %s607 = smul.f32 %s590, %s606
    %v608 = vrcp.pop 512.0
    %s609 = vtos %v608
    %s610 = smul.f32 %s604, %s609
    %s611 = smul.f32 %s607, %s607
    %s612 = ssub.f32 %s610, %s611
    %s613 = smax.f32 %s612, 0.0
    %v614 = vstv %s607
    %v615 = vsub.f32 %v577, %v614
    %v616 = vsub.f32 %v578, %v614
    %s617 = sadd.f32 %s613, 1e-05
    %v618 = vstv %s617
    %v619 = vrsqrt.pop %v618
    %s620 = vtos %v619
    %v621 = vstv %s620
    %v622 = vmul.f32 %v615, %v621
    %v623 = vmul.f32 %v616, %v621
    %v624 = vpack.c.bf16 %v623, %v622
    %627 = vrot.lane.b32.xlu0 %v385, 32
    %v628 = vpop.permute.xlu0 %627
    %629 = vrot.lane.b32.xlu0 %v386, 32
    %v630 = vpop.permute.xlu0 %629
    %635 = vrot.lane.b32.xlu0 %v622, 64
    %v636 = vpop.permute.xlu0 %635
    %637 = vrot.lane.b32.xlu0 %v623, 64
    %v638 = vpop.permute.xlu0 %637
    %v641 = vsel %vm217, %v138, %v628
    %v642 = vsel %vm217, %v139, %v630
    %vm643 = vcmask 523264
    %v644 = vsel %vm643, %v641, %v636
    %v645 = vsel %vm643, %v642, %v638
    %647 = vrot.lane.b32.xlu0 %v387, 32
    %v648 = vpop.permute.xlu0 %647
    %650 = vrot.lane.b32.xlu0 %v624, 64
    %v651 = vpop.permute.xlu0 %650
    %v654 = vsel %vm217, %v140, %v648
    %v656 = vsel %vm643, %v654, %v651
    %v658 = vld [vmem:[%s2] sm:$0x1]
    %v659 = vunpack.c.l.bf16 %v658
    %vm660 = vcmask 123904
    %v661 = vsel %vm660, %v659, 0.0
    %662 = vadd.xlane.f32.xlu0 %v661
    %v663 = vpop.xlane.xlu0 %662
    %v664 = vmax.f32 %v663, 1.0
    %v665 = vrcp.pop %v664
    %v666 = vld [vmem:[%s3] sm:$0xff]
    %v667 = vld [vmem:[%s3 + $0x8] sm:$0xff]
    %669 = vset.pattern.permute.xlu0 0
    %670 = vperm.xlu0 %669, %v666
    %v671 = vpop.permute.xlu0 %670
    %674 = vset.pattern.permute.xlu0 0
    %675 = vperm.xlu0 %674, %v667
    %v676 = vpop.permute.xlu0 %675
    %v678 = vadd.f32 %v644, %v671
    %v679 = vadd.f32 %v645, %v676
    %vm680 = vcmask 785408
    %v681 = vsel %vm680, %v678, -inf
    %v682 = vsel %vm680, %v679, -inf
    %v683 = vmax.f32 %v681, %v682
    %v684 = vrot.slane %v683, 4
    %v685 = vmax.f32 %v683, %v684
    %v686 = vrot.slane %v685, 2
    %v687 = vmax.f32 %v685, %v686
    %v688 = vrot.slane %v687, 1
    %v689 = vmax.f32 %v687, %v688
    %690 = vset.pattern.permute.xlu0 1
    %691 = vperm.xlu0 %690, %v666
    %v692 = vpop.permute.xlu0 %691
    %694 = vset.pattern.permute.xlu0 1
    %695 = vperm.xlu0 %694, %v667
    %v696 = vpop.permute.xlu0 %695
    %v698 = vadd.f32 %v644, %v692
    %v699 = vadd.f32 %v645, %v696
    %v700 = vsel %vm680, %v698, -inf
    %v701 = vsel %vm680, %v699, -inf
    %v702 = vmax.f32 %v700, %v701
    %v703 = vrot.slane %v702, 4
    %v704 = vmax.f32 %v702, %v703
    %v705 = vrot.slane %v704, 2
    %v706 = vmax.f32 %v704, %v705
    %v707 = vrot.slane %v706, 1
    %v708 = vmax.f32 %v706, %v707
    %vm709 = vcmask 1040384
    %v710 = vsel %vm709, %v689, %v708
    %v712 = vsel %vm146, %v658, 0
    %714 = vmatprep.subr.bf16.mxu0 0
    %715 = vmatpush1.bf16.msra.mxu0 0
    %716 = vmatprep.subr.bf16.mxu0 0
    %717 = vmatpush1.bf16.msra.mxu0 0
    %718 = vmatprep.subr.bf16.mxu0 0
    %719 = vmatpush1.bf16.msra.mxu0 0
    %720 = vmatprep.subr.bf16.mxu0 0
    %721 = vmatpush1.bf16.msra.mxu0 0
    %722 = vmatprep.subr.bf16.mxu0 0
    %723 = vmatpush1.bf16.msra.mxu0 0
    %724 = vmatprep.subr.bf16.mxu0 0
    %725 = vmatpush1.bf16.msra.mxu0 0
    %726 = vmatprep.subr.bf16.mxu0 0
    %727 = vmatpush1.bf16.msra.mxu0 0
    %728 = vmatprep.subr.bf16.mxu0 0
    %729 = vmatpush1.bf16.msra.mxu0 %v656
    %730 = vmatprep.subr.bf16.mxu0 0
    %731 = vmatpush2.bf16.msra.mxu0 0
    %732 = vmatprep.subr.bf16.mxu0 0
    %733 = vmatpush2.bf16.msra.mxu0 0
    %734 = vmatprep.subr.bf16.mxu0 0
    %735 = vmatpush2.bf16.msra.mxu0 0
    %736 = vmatprep.subr.bf16.mxu0 0
    %737 = vmatpush2.bf16.msra.mxu0 0
    %738 = vmatprep.subr.bf16.mxu0 0
    %739 = vmatpush2.bf16.msra.mxu0 0
    %740 = vmatprep.subr.bf16.mxu0 0
    %741 = vmatpush2.bf16.msra.mxu0 0
    %742 = vmatprep.subr.bf16.mxu0 0
    %743 = vmatpush2.bf16.msra.mxu0 0
    %744 = vmatprep.subr.bf16.mxu0 0
    %745 = vmatpush2.bf16.msra.mxu0 0
    %746 = vmatprep.mubr.bf16.mxu0 0
    %747 = vmatmul.mubr.bf16.gmra.mxu0 %v712
    %v748 = vpop.f32.mrf.mxu0
    %v749 = vadd.f32 0.0, %v748
    %v750 = vpop.f32.mrf.mxu0
    %v751 = vpop.f32.mrf.mxu0
    %v752 = vpop.f32.mrf.mxu0
    %753 = vdwg.mxu0
    %v754 = vmul.f32 %v749, %v665
    %756 = vrot.lane.b32.xlu0 %v754, 96
    %v757 = vpop.permute.xlu0 %756
    %v759 = vsel %vm680, %v710, %v757
    %v760 = vpack.c.bf16 %v759, %v759
    %v761 = vpack.c.bf16 %v757, %v757
    %v762 = vld [vmem:[%s14] sm:$0xf]
    %v763 = vld [vmem:[%s14 + $0x4] sm:$0xf]
    %v764 = vld [vmem:[%s14 + $0x8] sm:$0xf]
    %v765 = vld [vmem:[%s14 + $0xc] sm:$0xf]
    %v766 = vld [vmem:[%s14 + $0x10] sm:$0xf]
    %v767 = vld [vmem:[%s14 + $0x14] sm:$0xf]
    %v768 = vld [vmem:[%s14 + $0x18] sm:$0xf]
    %v769 = vld [vmem:[%s14 + $0x1c] sm:$0xf]
    %v770 = vld [vmem:[%s14 + $0x20] sm:$0xf]
    %v771 = vld [vmem:[%s14 + $0x24] sm:$0xf]
    %v772 = vld [vmem:[%s14 + $0x28] sm:$0xf]
    %v773 = vld [vmem:[%s14 + $0x2c] sm:$0xf]
    %v774 = vld [vmem:[%s14 + $0x30] sm:$0xf]
    %v775 = vld [vmem:[%s14 + $0x34] sm:$0xf]
    %v776 = vld [vmem:[%s14 + $0x38] sm:$0xf]
    %v777 = vld [vmem:[%s14 + $0x3c] sm:$0xf]
    %v778 = vld [vmem:[%s14 + $0x40] sm:$0xf]
    %v779 = vld [vmem:[%s14 + $0x44] sm:$0xf]
    %v780 = vld [vmem:[%s14 + $0x48] sm:$0xf]
    %v781 = vld [vmem:[%s14 + $0x4c] sm:$0xf]
    %v782 = vld [vmem:[%s14 + $0x50] sm:$0xf]
    %v783 = vld [vmem:[%s14 + $0x54] sm:$0xf]
    %v784 = vld [vmem:[%s14 + $0x58] sm:$0xf]
    %v785 = vld [vmem:[%s14 + $0x5c] sm:$0xf]
    %v786 = vld [vmem:[%s15] sm:$0x1]
    %v788 = vlaneseq
    %v789 = vshrl.u32 %v788, 7
    %v790 = vsub.s32 0, %v789
    %v791 = vrot.slane %v786, %v790
    %v817 = vunpack.c.l.b16 %v762
    %v818 = vunpack.c.l.b16 %v763
    %v819 = vunpack.c.l.b16 %v764
    %v820 = vunpack.c.l.b16 %v765
    %v821 = vunpack.c.l.b16 %v766
    %v822 = vunpack.c.l.b16 %v767
    %v823 = vunpack.c.l.b16 %v768
    %v824 = vunpack.c.l.b16 %v769
    %v825 = vunpack.c.l.b16 %v770
    %v826 = vunpack.c.l.b16 %v771
    %v827 = vunpack.c.l.b16 %v772
    %v828 = vunpack.c.l.b16 %v773
    %v829 = vunpack.c.l.b16 %v774
    %v830 = vunpack.c.l.b16 %v775
    %v831 = vunpack.c.l.b16 %v776
    %v832 = vunpack.c.l.b16 %v777
    %v833 = vunpack.c.l.b16 %v778
    %v834 = vunpack.c.l.b16 %v779
    %v835 = vunpack.c.l.b16 %v780
    %v836 = vunpack.c.l.b16 %v781
    %v837 = vunpack.c.l.b16 %v782
    %v838 = vunpack.c.l.b16 %v783
    %v839 = vunpack.c.l.b16 %v784
    %v840 = vunpack.c.l.b16 %v785
    %v841 = vpack.c.b16 %v818, %v817
    %v842 = vpack.c.b16 %v820, %v819
    %v843 = vpack.c.b16 %v822, %v821
    %v844 = vpack.c.b16 %v824, %v823
    %v845 = vpack.c.b16 %v826, %v825
    %v846 = vpack.c.b16 %v828, %v827
    %v847 = vpack.c.b16 %v830, %v829
    %v848 = vpack.c.b16 %v832, %v831
    %v849 = vpack.c.b16 %v834, %v833
    %v850 = vpack.c.b16 %v836, %v835
    %v851 = vpack.c.b16 %v838, %v837
    %v852 = vpack.c.b16 %v840, %v839
    %v866 = vsel %vm643, %v761, 0
    %868 = vmatprep.subr.bf16.mxu0 0
    %869 = vmatpush1.bf16.msra.mxu0 %v848
    %870 = vmatprep.subr.bf16.mxu0 0
    %871 = vmatpush1.bf16.msra.mxu0 %v847
    %872 = vmatprep.subr.bf16.mxu0 0
    %873 = vmatpush1.bf16.msra.mxu0 %v846
    %874 = vmatprep.subr.bf16.mxu0 0
    %875 = vmatpush1.bf16.msra.mxu0 %v845
    %876 = vmatprep.subr.bf16.mxu0 0
    %877 = vmatpush1.bf16.msra.mxu0 %v844
    %878 = vmatprep.subr.bf16.mxu0 0
    %879 = vmatpush1.bf16.msra.mxu0 %v843
    %880 = vmatprep.subr.bf16.mxu0 0
    %881 = vmatpush1.bf16.msra.mxu0 %v842
    %882 = vmatprep.subr.bf16.mxu0 0
    %883 = vmatpush1.bf16.msra.mxu0 %v841
    %884 = vmatprep.subr.bf16.mxu0 0
    %885 = vmatpush2.bf16.msra.mxu0 0
    %886 = vmatprep.subr.bf16.mxu0 0
    %887 = vmatpush2.bf16.msra.mxu0 0
    %888 = vmatprep.subr.bf16.mxu0 0
    %889 = vmatpush2.bf16.msra.mxu0 0
    %890 = vmatprep.subr.bf16.mxu0 0
    %891 = vmatpush2.bf16.msra.mxu0 0
    %892 = vmatprep.subr.bf16.mxu0 0
    %893 = vmatpush2.bf16.msra.mxu0 %v852
    %894 = vmatprep.subr.bf16.mxu0 0
    %895 = vmatpush2.bf16.msra.mxu0 %v851
    %896 = vmatprep.subr.bf16.mxu0 0
    %897 = vmatpush2.bf16.msra.mxu0 %v850
    %898 = vmatprep.subr.bf16.mxu0 0
    %899 = vmatpush2.bf16.msra.mxu0 %v849
    %900 = vmatprep.mubr.bf16.mxu0 %v866
    %901 = vmatmul.mubr.bf16.gmra.mxu0 %v760
    %v902 = vpop.f32.mrf.mxu0
    %v903 = vadd.f32 %v791, %v902
    %v904 = vpop.f32.mrf.mxu0
    %v905 = vpop.f32.mrf.mxu0
    %v906 = vpop.f32.mrf.mxu0
    %907 = vdwg.mxu0
    %vm908 = vcmp.gt.f32.partialorder %v903, 0.0
    %v909 = vmul.f32 %v903, 1.442695
    %v910 = vpow.pop %v909
    %v911 = vsub.f32 %v910, 1.0
    %v912 = vsel %vm908, %v903, %v911
    %vm913 = vcmask 254976
    %914 = vst.msk [vmem:[#allocation4] sm:$0x3] %vm913, %v912
    %v915 = vpack.c.bf16 %v912, %v912
    %v916 = vld [vmem:[%s16] sm:$0xf]
    %v917 = vld [vmem:[%s16 + $0x4] sm:$0xf]
    %v918 = vld [vmem:[%s16 + $0x8] sm:$0xf]
    %v919 = vld [vmem:[%s16 + $0xc] sm:$0xf]
    %v920 = vld [vmem:[%s17] sm:$0x1]
    %v922 = vlaneseq
    %v923 = vshrl.u32 %v922, 7
    %v924 = vsub.s32 0, %v923
    %v925 = vrot.slane %v920, %v924
    %v931 = vunpack.c.l.b16 %v916
    %v932 = vunpack.c.l.b16 %v917
    %v933 = vunpack.c.l.b16 %v918
    %v934 = vunpack.c.l.b16 %v919
    %v935 = vpack.c.b16 %v932, %v931
    %v936 = vpack.c.b16 %v934, %v933
    %v940 = vsel %vm217, %v915, 0
    %942 = vmatprep.subr.bf16.mxu0 0
    %943 = vmatpush1.bf16.msra.mxu0 0
    %944 = vmatprep.subr.bf16.mxu0 0
    %945 = vmatpush1.bf16.msra.mxu0 0
    %946 = vmatprep.subr.bf16.mxu0 0
    %947 = vmatpush1.bf16.msra.mxu0 0
    %948 = vmatprep.subr.bf16.mxu0 0
    %949 = vmatpush1.bf16.msra.mxu0 0
    %950 = vmatprep.subr.bf16.mxu0 0
    %951 = vmatpush1.bf16.msra.mxu0 0
    %952 = vmatprep.subr.bf16.mxu0 0
    %953 = vmatpush1.bf16.msra.mxu0 0
    %954 = vmatprep.subr.bf16.mxu0 0
    %955 = vmatpush1.bf16.msra.mxu0 %v936
    %956 = vmatprep.subr.bf16.mxu0 0
    %957 = vmatpush1.bf16.msra.mxu0 %v935
    %958 = vmatprep.subr.bf16.mxu0 0
    %959 = vmatpush2.bf16.msra.mxu0 0
    %960 = vmatprep.subr.bf16.mxu0 0
    %961 = vmatpush2.bf16.msra.mxu0 0
    %962 = vmatprep.subr.bf16.mxu0 0
    %963 = vmatpush2.bf16.msra.mxu0 0
    %964 = vmatprep.subr.bf16.mxu0 0
    %965 = vmatpush2.bf16.msra.mxu0 0
    %966 = vmatprep.subr.bf16.mxu0 0
    %967 = vmatpush2.bf16.msra.mxu0 0
    %968 = vmatprep.subr.bf16.mxu0 0
    %969 = vmatpush2.bf16.msra.mxu0 0
    %970 = vmatprep.subr.bf16.mxu0 0
    %971 = vmatpush2.bf16.msra.mxu0 0
    %972 = vmatprep.subr.bf16.mxu0 0
    %973 = vmatpush2.bf16.msra.mxu0 0
    %974 = vmatprep.mubr.bf16.mxu0 0
    %975 = vmatmul.mubr.bf16.gmra.mxu0 %v940
    %v976 = vpop.f32.mrf.mxu0
    %v977 = vadd.f32 %v925, %v976
    %v978 = vpop.f32.mrf.mxu0
    %v979 = vpop.f32.mrf.mxu0
    %v980 = vpop.f32.mrf.mxu0
    %981 = vdwg.mxu0
    %vm982 = vcmask 25600
    %v983 = vsel %vm982, %v977, -inf
    %984 = vmax.xlane.f32.xlu0 %v983
    %v985 = vpop.xlane.xlu0 %984
    %v986 = vsub.f32 %v977, %v985
    %v987 = vmul.f32 %v986, 1.442695
    %v988 = vpow.pop %v987
    %v989 = vsel %vm982, %v988, 0.0
    %990 = vadd.xlane.f32.xlu0 %v989
    %v991 = vpop.xlane.xlu0 %990
    %v992 = vlog2.pop %v991
    %v993 = vmul.f32 %v992, 0.6931472
    %v994 = vsub.f32 %v986, %v993
    %995 = vst.msk [vmem:[#allocation2] sm:$0x3] %vm982, %v994
    // Predicated region
    $region74: #{gencoder_forward.1} parent=1 // pred_check
      _
    $region75: #{gencoder_forward.1} parent=1 // pred_check_branch
      %997 = sbr.rel (0) target = $region77
    $region76: #{gencoder_forward.1} parent=1 // pred_region
      %s999 = ssub.s32 32, 32
      %1000 = vsyncadd [#allocation3], %s999
      %s1002 = sshll.u32 [#allocation2], 4
      %s1003 = int_to_ptr.vmem [resolvable:$true] %s1002
      %1005 = dma.vmem_to_hbm [thread:$0]  %s1003, 32, %s18, [#allocation3]
    $region77: #{gencoder_forward.1} parent=1 // pred_fallthru
      _
    // Predicated region
    $region78: #{gencoder_forward.1} parent=1 // pred_check
      _
    $region79: #{gencoder_forward.1} parent=1 // pred_check_branch
      %1007 = sbr.rel (0) target = $region81
    $region80: #{gencoder_forward.1} parent=1 // pred_region
      %s1009 = ssub.s32 32, 32
      %1010 = vsyncadd [#allocation5], %s1009
      %s1012 = sshll.u32 [#allocation4], 4
      %s1013 = int_to_ptr.vmem [resolvable:$true] %s1012
      %1015 = dma.vmem_to_hbm [thread:$0]  %s1013, 32, %s19, [#allocation5]
    $region81: #{gencoder_forward.1} parent=1 // pred_fallthru
      _
    // Predicated region
    $region82: #{gencoder_forward.1} parent=1 // pred_check
      _
    $region83: #{gencoder_forward.1} parent=1 // pred_check_branch
      %1017 = sbr.rel (0) target = $region85
    $region84: #{gencoder_forward.1} parent=1 // pred_region
      %1018 = dma.done [#allocation3], 32
    $region85: #{gencoder_forward.1} parent=1 // pred_fallthru
      _
    // Predicated region
    $region86: #{gencoder_forward.1} parent=1 // pred_check
      _
    $region87: #{gencoder_forward.1} parent=1 // pred_check_branch
      %1020 = sbr.rel (0) target = $region89
    $region88: #{gencoder_forward.1} parent=1 // pred_region
      %1021 = dma.done [#allocation5], 32
    $region89: #{gencoder_forward.1} parent=1 // pred_fallthru
      _
    %1022 = vsyncpa [#allocation3], 1
    %1023 = vsyncpa [#allocation5], 1

</llo_original>
